<compile_context>
chip_gen: v6e
topology: v6e:2x2x1
jax: 0.10.0
libtpu: 0.0.40
codegen_flags: <defaults>
</compile_context>

<pallas_src>
import functools
import math

import jax
import jax.numpy as jnp
from jax import lax
from jax.experimental import pallas as pl
from jax.experimental.pallas import tpu as pltpu

_LANE = 128
_VMEM_LIMIT = 32 * 1024 * 1024
_FUSED_MAX_N = 512          # below this, the whole graph fits comfortably in VMEM


# ---------------------------------------------------------------------------
# Kernel bodies
# ---------------------------------------------------------------------------

def _gcn_fused_attn_kernel(x_ref, wqk3_ref, bqk3_ref, b1_ref,
                           w11_ref, b11_ref, w12_ref, b12_ref,
                           w2p_ref, b2p_ref, o_ref, *, nhid):
    """Whole forward in one block (small N). wqk3 = [Wq^T*scale | Wk^T | W1]."""
    xb = x_ref[...].astype(jnp.bfloat16)
    # Single [N,F] x [F,3H] MXU pass: q (pre-scaled), k, and gc1 support.
    proj = jnp.dot(xb, wqk3_ref[...],
                   preferred_element_type=jnp.float32) + bqk3_ref[...]
    q = proj[:, :nhid]
    k = proj[:, nhid:2 * nhid]
    s1 = proj[:, 2 * nhid:]

    # att = (q_scaled) @ k^T  -- contract last dims directly, no transpose.
    att = lax.dot_general(q.astype(jnp.bfloat16), k.astype(jnp.bfloat16),
                          (((1,), (1,)), ((), ())),
                          preferred_element_type=jnp.float32)
    att = att - jnp.max(att, axis=-1, keepdims=True)
    e = jnp.exp(att)
    adj = e * pl.reciprocal(jnp.sum(e, axis=-1, keepdims=True), approx=True)
    adjb = adj.astype(jnp.bfloat16)

    def gconv(h, w_ref, b_ref, relu):
        sup = jnp.dot(h.astype(jnp.bfloat16), w_ref[...],
                      preferred_element_type=jnp.float32)
        out = jnp.dot(adjb, sup.astype(jnp.bfloat16),
                      preferred_element_type=jnp.float32) + b_ref[...]
        return jnp.maximum(out, 0.0) if relu else out

    h = jnp.maximum(
        jnp.dot(adjb, s1.astype(jnp.bfloat16),
                preferred_element_type=jnp.float32) + b1_ref[...], 0.0)
    h = gconv(h, w11_ref, b11_ref, True)
    h = gconv(h, w12_ref, b12_ref, True)
    o_ref[...] = gconv(h, w2p_ref, b2p_ref, False)      # lane-dense (rows,128)


def _attn_gc1_kernel(xt_ref, xf_ref, wqk3_ref, bqk3_ref, b1_ref,
                     adj_ref, h1_ref, *, nhid):
    """Row tile of softmax(adj) (bf16, to HBM) plus gc1 rows."""
    wqk3 = wqk3_ref[...]                      # bf16 [F, 3H]
    bqk3 = bqk3_ref[...]                      # f32  [1, 3H]
    pt = jnp.dot(xt_ref[...].astype(jnp.bfloat16), wqk3,
                 preferred_element_type=jnp.float32) + bqk3   # [tile, 3H]
    pf = jnp.dot(xf_ref[...].astype(jnp.bfloat16), wqk3,
                 preferred_element_type=jnp.float32) + bqk3   # [N, 3H]
    q = pt[:, :nhid]                          # scale already folded in
    k = pf[:, nhid:2 * nhid]
    s1 = pf[:, 2 * nhid:]

    att = lax.dot_general(q.astype(jnp.bfloat16), k.astype(jnp.bfloat16),
                          (((1,), (1,)), ((), ())),
                          preferred_element_type=jnp.float32)
    att = att - jnp.max(att, axis=-1, keepdims=True)
    e = jnp.exp(att)
    adj = e * pl.reciprocal(jnp.sum(e, axis=-1, keepdims=True), approx=True)
    adj_ref[...] = adj.astype(adj_ref.dtype)  # bf16 row tile -> HBM

    h1 = jnp.dot(adj.astype(jnp.bfloat16), s1.astype(jnp.bfloat16),
                 preferred_element_type=jnp.float32) + b1_ref[...]
    h1_ref[...] = jnp.maximum(h1, 0.0)


def _gconv_kernel(adj_ref, h_ref, w_ref, b_ref, o_ref, *, relu):
    """One GraphConvolution for a row tile of adj; h/weights VMEM-resident."""
    sup = jnp.dot(h_ref[...].astype(jnp.bfloat16), w_ref[...],
                  preferred_element_type=jnp.float32)
    out = jnp.dot(adj_ref[...].astype(jnp.bfloat16), sup.astype(jnp.bfloat16),
                  preferred_element_type=jnp.float32) + b_ref[...]
    o_ref[...] = jnp.maximum(out, 0.0) if relu else out


# ---------------------------------------------------------------------------
# BlockSpec helpers (all grids are 1-D over row tiles)
# ---------------------------------------------------------------------------

def _const_spec(shape):
    nd = len(shape)
    return pl.BlockSpec(tuple(shape), lambda i: (0,) * nd)   # DMA'd once, resident


def _row_spec(tile, shape):
    nd = len(shape)
    return pl.BlockSpec((tile,) + tuple(shape[1:]),
                        lambda i: (i,) + (0,) * (nd - 1))


def _vmem_budget_bytes():
    try:
        vmem = int(pltpu.get_tpu_info().vmem_capacity_bytes)
    except Exception:
        vmem = 64 << 20
    return min(vmem, 64 << 20) // 2          # headroom for weights / compiler scratch


def _pick_row_tile(n):
    budget = _vmem_budget_bytes()
    # ~4 live f32 [tile, n] temporaries in the attention kernel + 2 bf16 buffers.
    per_row = n * 4 * 4 + 2 * n * 2
    cap = max(16, budget // max(per_row, 1))
    for t in (512, 256, 128, 64, 32, 16):
        if t <= cap and n % t == 0:
            return t
    return n                                  # fallback: single full-row block


# ---------------------------------------------------------------------------
# pallas_call wrappers
# ---------------------------------------------------------------------------

def _forward_fused(kp, x):
    n = x.shape[0]
    ncpad = kp["w2p"].shape[1]
    ops = (x, kp["wqk3"], kp["bqk3"], kp["b1"], kp["w11"], kp["b11"],
           kp["w12"], kp["b12"], kp["w2p"], kp["b2p"])
    out = pl.pallas_call(
        functools.partial(_gcn_fused_attn_kernel, nhid=kp["nhid"]),
        grid=(1,),
        in_specs=[_const_spec(op.shape) for op in ops],
        out_specs=_const_spec((n, ncpad)),
        out_shape=jax.ShapeDtypeStruct((n, ncpad), jnp.float32),
        compiler_params=pltpu.CompilerParams(
            dimension_semantics=("arbitrary",),
            vmem_limit_bytes=_VMEM_LIMIT),
    )(*ops)
    return out[:, :kp["nclass"]]


def _gconv_call(adj, h, w, b, relu, tile):
    n = adj.shape[0]
    hout = w.shape[1]
    return pl.pallas_call(
        functools.partial(_gconv_kernel, relu=relu),
        grid=(n // tile,),
        in_specs=[_row_spec(tile, adj.shape), _const_spec(h.shape),
                  _const_spec(w.shape), _const_spec(b.shape)],
        out_specs=_row_spec(tile, (n, hout)),
        out_shape=jax.ShapeDtypeStruct((n, hout), jnp.float32),
        compiler_params=pltpu.CompilerParams(
            dimension_semantics=("parallel",),
            vmem_limit_bytes=_VMEM_LIMIT),
    )(adj, h, w, b)


def _forward_tiled(kp, x):
    n = x.shape[0]
    tile = _pick_row_tile(n)
    nhid = kp["nhid"]
    adj, h1 = pl.pallas_call(
        functools.partial(_attn_gc1_kernel, nhid=nhid),
        grid=(n // tile,),
        in_specs=[_row_spec(tile, x.shape), _const_spec(x.shape),
                  _const_spec(kp["wqk3"].shape), _const_spec(kp["bqk3"].shape),
                  _const_spec(kp["b1"].shape)],
        out_specs=[_row_spec(tile, (n, n)), _row_spec(tile, (n, nhid))],
        out_shape=(jax.ShapeDtypeStruct((n, n), jnp.bfloat16),
                   jax.ShapeDtypeStruct((n, nhid), jnp.float32)),
        compiler_params=pltpu.CompilerParams(
            dimension_semantics=("parallel",),
            vmem_limit_bytes=_VMEM_LIMIT),
    )(x, x, kp["wqk3"], kp["bqk3"], kp["b1"])

    h = _gconv_call(adj, h1, kp["w11"], kp["b11"], True, tile)
    h = _gconv_call(adj, h, kp["w12"], kp["b12"], True, tile)
    out = _gconv_call(adj, h, kp["w2p"], kp["b2p"], False, tile)
    return out[:, :kp["nclass"]]


def _forward_given_adj(kp, x, adj):
    tile = _pick_row_tile(x.shape[0])
    h = _gconv_call(adj, x, kp["w1"], kp["b1"], True, tile)
    h = _gconv_call(adj, h, kp["w11"], kp["b11"], True, tile)
    h = _gconv_call(adj, h, kp["w12"], kp["b12"], True, tile)
    out = _gconv_call(adj, h, kp["w2p"], kp["b2p"], False, tile)
    return out[:, :kp["nclass"]]


def gcn_forward(kparams, x, adj=None):
    """Forward pass with prepared kernel params (see prepare_kernel_params)."""
    if adj is not None:
        return _forward_given_adj(kparams, x, adj)
    if x.shape[0] <= _FUSED_MAX_N:
        return _forward_fused(kparams, x)       # single launch, all VMEM-resident
    return _forward_tiled(kparams, x)           # row-tiled, adj streamed as bf16


# ---------------------------------------------------------------------------
# Parameters: torch-style init + one-time kernel-operand transform
# ---------------------------------------------------------------------------

def init_params(key, nfeat, nhid, nclass):
    ks = jax.random.split(key, 12)

    def lin(kw, kb, fan_in, fan_out):
        bound = 1.0 / math.sqrt(fan_in)
        w = jax.random.uniform(kw, (fan_out, fan_in), jnp.float32, -bound, bound)
        b = jax.random.uniform(kb, (fan_out,), jnp.float32, -bound, bound)
        return w, b

    def gcn(kw, kb, fan_in, fan_out):
        stdv = 1.0 / math.sqrt(fan_out)
        w = jax.random.uniform(kw, (fan_in, fan_out), jnp.float32, -stdv, stdv)
        b = jax.random.uniform(kb, (fan_out,), jnp.float32, -stdv, stdv)
        return w, b

    return {
        "mlp_q": lin(ks[0], ks[1], nfeat, nhid),
        "mlp_k": lin(ks[2], ks[3], nfeat, nhid),
        "gc1": gcn(ks[4], ks[5], nfeat, nhid),
        "gc11": gcn(ks[6], ks[7], nhid, nhid),
        "gc12": gcn(ks[8], ks[9], nhid, nhid),
        "gc2": gcn(ks[10], ks[11], nhid, nclass),
    }


def prepare_kernel_params(params):
    """One-time transform: fuse Wq/Wk/W1, fold softmax scale, pad gc2, bf16 weights."""
    wq, bq = params["mlp_q"]
    wk, bk = params["mlp_k"]
    w1, b1 = params["gc1"]
    w11, b11 = params["gc11"]
    w12, b12 = params["gc12"]
    w2, b2 = params["gc2"]
    nhid = w1.shape[1]
    nclass = w2.shape[1]
    scale = 1.0 / math.sqrt(float(nhid))

    wqk3 = jnp.concatenate([wq.T * scale, wk.T, w1], axis=1)            # [F, 3H]
    bqk3 = jnp.concatenate([bq * scale, bk,
                            jnp.zeros((nhid,), jnp.float32)]).reshape(1, 3 * nhid)

    ncpad = max(_LANE, pl.cdiv(nclass, _LANE) * _LANE)
    w2p = jnp.zeros((nhid, ncpad), jnp.float32).at[:, :nclass].set(w2)
    b2p = jnp.zeros((ncpad,), jnp.float32).at[:nclass].set(b2)

    bf = lambda a: a.astype(jnp.bfloat16)
    return {
        "nhid": nhid, "nclass": nclass,
        "wqk3": bf(wqk3), "bqk3": bqk3,
        "w1": bf(w1), "b1": b1.reshape(1, -1),
        "w11": bf(w11), "b11": b11.reshape(1, -1),
        "w12": bf(w12), "b12": b12.reshape(1, -1),
        "w2p": bf(w2p), "b2p": b2p.reshape(1, -1),
    }


# ---------------------------------------------------------------------------
# Pure-JAX reference (f32, exact softmax) for correctness checking
# ---------------------------------------------------------------------------

def gcn_reference(params, x, adj=None):
    wq, bq = params["mlp_q"]
    wk, bk = params["mlp_k"]
    if adj is None:
        q = x @ wq.T + bq
        k = x @ wk.T + bk
        att = (q @ k.T) / math.sqrt(k.shape[-1])
        adj = jax.nn.softmax(att, axis=-1)
    gc = lambda h, p: adj @ (h @ p[0]) + p[1]
    h = jax.nn.relu(gc(x, params["gc1"]))
    h = jax.nn.relu(gc(h, params["gc11"]))
    h = jax.nn.relu(gc(h, params["gc12"]))
    return gc(h, params["gc2"])


# ---------------------------------------------------------------------------
# Demo / self-check
# ---------------------------------------------------------------------------

if __name__ == "__main__":
    NFEAT, NHID, NCLASS = 8, 32, 4

    key = jax.random.PRNGKey(0)
    k_param, k_x1, k_x2, k_adj = jax.random.split(key, 4)
    params = init_params(k_param, NFEAT, NHID, NCLASS)
    kparams = prepare_kernel_params(params)     # one-time operand transform

    def check(n, kx, adj=None):
        x = jax.random.normal(kx, (n, NFEAT), jnp.float32)
        out = jax.block_until_ready(gcn_forward(kparams, x, adj=adj))
        assert out.shape == (n, NCLASS), out.shape
        assert out.dtype == jnp.float32
        assert bool(jnp.all(jnp.isfinite(out)))
        ref = gcn_reference(params, x, adj=adj)
        err = float(jnp.max(jnp.abs(out - ref)) / (jnp.max(jnp.abs(ref)) + 1e-6))
        assert err < 5e-2, f"n={n}: normalized max error {err}"

    # small graph -> single fused kernel (attention-derived adj)
    check(16, k_x1)
    # larger graph -> row-tiled path: bf16 adj streamed, 'parallel' row grid
    check(1024, k_x2)
    # explicit adjacency path
    adj16 = jax.nn.softmax(jax.random.normal(k_adj, (16, 16), jnp.float32), axis=-1)
    check(16, k_x1, adj=adj16)

    print("KERNEL_OK")
</pallas_src>

<mosaic_0001>
module attributes {stable_mosaic.version = 11 : i64} {
  func.func @_gcn_fused_attn_kernel(%arg0: i32, %arg1: memref<16x8xf32, #tpu.memory_space<vmem>>, %arg2: memref<8x96xbf16, #tpu.memory_space<vmem>>, %arg3: memref<1x96xf32, #tpu.memory_space<vmem>>, %arg4: memref<1x32xf32, #tpu.memory_space<vmem>>, %arg5: memref<32x32xbf16, #tpu.memory_space<vmem>>, %arg6: memref<1x32xf32, #tpu.memory_space<vmem>>, %arg7: memref<32x32xbf16, #tpu.memory_space<vmem>>, %arg8: memref<1x32xf32, #tpu.memory_space<vmem>>, %arg9: memref<32x128xbf16, #tpu.memory_space<vmem>>, %arg10: memref<1x128xf32, #tpu.memory_space<vmem>>, %arg11: memref<16x128xf32, #tpu.memory_space<vmem>>) attributes {dimension_semantics = [#tpu.dimension_semantics<arbitrary>], iteration_bounds = array<i64: 1>, scalar_prefetch = 0 : i64, scratch_operands = 0 : i64, tpu.core_type = #tpu.core_type<tc>, window_params = [{pipeline_mode = #tpu.pipeline_mode<synchronous>, transform_indices = @transform_0, window_bounds = array<i64: 16, 8>}, {pipeline_mode = #tpu.pipeline_mode<synchronous>, transform_indices = @transform_1, window_bounds = array<i64: 8, 96>}, {pipeline_mode = #tpu.pipeline_mode<synchronous>, transform_indices = @transform_2, window_bounds = array<i64: 1, 96>}, {pipeline_mode = #tpu.pipeline_mode<synchronous>, transform_indices = @transform_3, window_bounds = array<i64: 1, 32>}, {pipeline_mode = #tpu.pipeline_mode<synchronous>, transform_indices = @transform_4, window_bounds = array<i64: 32, 32>}, {pipeline_mode = #tpu.pipeline_mode<synchronous>, transform_indices = @transform_5, window_bounds = array<i64: 1, 32>}, {pipeline_mode = #tpu.pipeline_mode<synchronous>, transform_indices = @transform_6, window_bounds = array<i64: 32, 32>}, {pipeline_mode = #tpu.pipeline_mode<synchronous>, transform_indices = @transform_7, window_bounds = array<i64: 1, 32>}, {pipeline_mode = #tpu.pipeline_mode<synchronous>, transform_indices = @transform_8, window_bounds = array<i64: 32, 128>}, {pipeline_mode = #tpu.pipeline_mode<synchronous>, transform_indices = @transform_9, window_bounds = array<i64: 1, 128>}, {pipeline_mode = #tpu.pipeline_mode<synchronous>, transform_indices = @transform_10, window_bounds = array<i64: 16, 128>}]} {
    %c0 = arith.constant 0 : index
    %c0_0 = arith.constant 0 : index
    %0 = vector.load %arg1[%c0, %c0_0] : memref<16x8xf32, #tpu.memory_space<vmem>>, vector<16x8xf32>
    %1 = arith.truncf %0 : vector<16x8xf32> to vector<16x8xbf16>
    %c0_1 = arith.constant 0 : index
    %c0_2 = arith.constant 0 : index
    %2 = vector.load %arg2[%c0_1, %c0_2] : memref<8x96xbf16, #tpu.memory_space<vmem>>, vector<8x96xbf16>
    %cst = arith.constant dense<0.000000e+00> : vector<16x96xf32>
    %3 = tpu.matmul %1, %2, %cst {dimension_numbers = #tpu.dot_dimension_numbers<[1], [0], [0], [1], [0, 0, 1, 1], [], []>} : vector<16x8xbf16>, vector<8x96xbf16>, vector<16x96xf32> -> vector<16x96xf32>
    %c0_3 = arith.constant 0 : index
    %c0_4 = arith.constant 0 : index
    %4 = vector.load %arg3[%c0_3, %c0_4] : memref<1x96xf32, #tpu.memory_space<vmem>>, vector<1x96xf32>
    %5 = vector.broadcast %4 : vector<1x96xf32> to vector<16x96xf32>
    %6 = arith.addf %3, %5 : vector<16x96xf32>
    %7 = vector.extract_strided_slice %6 {offsets = [0, 0], sizes = [16, 32], strides = [1, 1]} : vector<16x96xf32> to vector<16x32xf32>
    %8 = vector.extract_strided_slice %6 {offsets = [0, 32], sizes = [16, 32], strides = [1, 1]} : vector<16x96xf32> to vector<16x32xf32>
    %9 = vector.extract_strided_slice %6 {offsets = [0, 64], sizes = [16, 32], strides = [1, 1]} : vector<16x96xf32> to vector<16x32xf32>
    %10 = arith.truncf %7 : vector<16x32xf32> to vector<16x32xbf16>
    %11 = arith.truncf %8 : vector<16x32xf32> to vector<16x32xbf16>
    %cst_5 = arith.constant dense<0.000000e+00> : vector<16x16xf32>
    %12 = tpu.matmul %10, %11, %cst_5 {dimension_numbers = #tpu.dot_dimension_numbers<[1], [1], [0], [0], [0, 0, 1, 0], [], []>} : vector<16x32xbf16>, vector<16x32xbf16>, vector<16x16xf32> -> vector<16x16xf32>
    %cst_6 = arith.constant dense<0xFF800000> : vector<16xf32>
    %13 = vector.multi_reduction <maximumf>, %12, %cst_6 [1] : vector<16x16xf32> to vector<16xf32>
    %14 = vector.shape_cast %13 : vector<16xf32> to vector<16x1xf32>
    %15 = vector.broadcast %14 : vector<16x1xf32> to vector<16x16xf32>
    %16 = arith.subf %12, %15 : vector<16x16xf32>
    %17 = math.exp %16 : vector<16x16xf32>
    %cst_7 = arith.constant dense<0.000000e+00> : vector<16xf32>
    %18 = vector.multi_reduction <add>, %17, %cst_7 [1] : vector<16x16xf32> to vector<16xf32>
    %19 = vector.shape_cast %18 : vector<16xf32> to vector<16x1xf32>
    %20 = tpu.reciprocal %19 {approx = true} : vector<16x1xf32> -> vector<16x1xf32>
    %21 = vector.broadcast %20 : vector<16x1xf32> to vector<16x16xf32>
    %22 = arith.mulf %17, %21 : vector<16x16xf32>
    %23 = arith.truncf %22 : vector<16x16xf32> to vector<16x16xbf16>
    %24 = arith.truncf %9 : vector<16x32xf32> to vector<16x32xbf16>
    %cst_8 = arith.constant dense<0.000000e+00> : vector<16x32xf32>
    %25 = tpu.matmul %23, %24, %cst_8 {dimension_numbers = #tpu.dot_dimension_numbers<[1], [0], [0], [1], [0, 0, 1, 1], [], []>} : vector<16x16xbf16>, vector<16x32xbf16>, vector<16x32xf32> -> vector<16x32xf32>
    %c0_9 = arith.constant 0 : index
    %c0_10 = arith.constant 0 : index
    %26 = vector.load %arg4[%c0_9, %c0_10] : memref<1x32xf32, #tpu.memory_space<vmem>>, vector<1x32xf32>
    %27 = vector.broadcast %26 : vector<1x32xf32> to vector<16x32xf32>
    %28 = arith.addf %25, %27 : vector<16x32xf32>
    %cst_11 = arith.constant 0.000000e+00 : f32
    %29 = vector.broadcast %cst_11 : f32 to vector<16x32xf32>
    %30 = arith.maximumf %28, %29 : vector<16x32xf32>
    %31 = arith.truncf %30 : vector<16x32xf32> to vector<16x32xbf16>
    %c0_12 = arith.constant 0 : index
    %c0_13 = arith.constant 0 : index
    %32 = vector.load %arg5[%c0_12, %c0_13] : memref<32x32xbf16, #tpu.memory_space<vmem>>, vector<32x32xbf16>
    %cst_14 = arith.constant dense<0.000000e+00> : vector<16x32xf32>
    %33 = tpu.matmul %31, %32, %cst_14 {dimension_numbers = #tpu.dot_dimension_numbers<[1], [0], [0], [1], [0, 0, 1, 1], [], []>} : vector<16x32xbf16>, vector<32x32xbf16>, vector<16x32xf32> -> vector<16x32xf32>
    %34 = arith.truncf %33 : vector<16x32xf32> to vector<16x32xbf16>
    %cst_15 = arith.constant dense<0.000000e+00> : vector<16x32xf32>
    %35 = tpu.matmul %23, %34, %cst_15 {dimension_numbers = #tpu.dot_dimension_numbers<[1], [0], [0], [1], [0, 0, 1, 1], [], []>} : vector<16x16xbf16>, vector<16x32xbf16>, vector<16x32xf32> -> vector<16x32xf32>
    %c0_16 = arith.constant 0 : index
    %c0_17 = arith.constant 0 : index
    %36 = vector.load %arg6[%c0_16, %c0_17] : memref<1x32xf32, #tpu.memory_space<vmem>>, vector<1x32xf32>
    %37 = vector.broadcast %36 : vector<1x32xf32> to vector<16x32xf32>
    %38 = arith.addf %35, %37 : vector<16x32xf32>
    %cst_18 = arith.constant 0.000000e+00 : f32
    %39 = vector.broadcast %cst_18 : f32 to vector<16x32xf32>
    %40 = arith.maximumf %38, %39 : vector<16x32xf32>
    %41 = arith.truncf %40 : vector<16x32xf32> to vector<16x32xbf16>
    %c0_19 = arith.constant 0 : index
    %c0_20 = arith.constant 0 : index
    %42 = vector.load %arg7[%c0_19, %c0_20] : memref<32x32xbf16, #tpu.memory_space<vmem>>, vector<32x32xbf16>
    %cst_21 = arith.constant dense<0.000000e+00> : vector<16x32xf32>
    %43 = tpu.matmul %41, %42, %cst_21 {dimension_numbers = #tpu.dot_dimension_numbers<[1], [0], [0], [1], [0, 0, 1, 1], [], []>} : vector<16x32xbf16>, vector<32x32xbf16>, vector<16x32xf32> -> vector<16x32xf32>
    %44 = arith.truncf %43 : vector<16x32xf32> to vector<16x32xbf16>
    %cst_22 = arith.constant dense<0.000000e+00> : vector<16x32xf32>
    %45 = tpu.matmul %23, %44, %cst_22 {dimension_numbers = #tpu.dot_dimension_numbers<[1], [0], [0], [1], [0, 0, 1, 1], [], []>} : vector<16x16xbf16>, vector<16x32xbf16>, vector<16x32xf32> -> vector<16x32xf32>
    %c0_23 = arith.constant 0 : index
    %c0_24 = arith.constant 0 : index
    %46 = vector.load %arg8[%c0_23, %c0_24] : memref<1x32xf32, #tpu.memory_space<vmem>>, vector<1x32xf32>
    %47 = vector.broadcast %46 : vector<1x32xf32> to vector<16x32xf32>
    %48 = arith.addf %45, %47 : vector<16x32xf32>
    %cst_25 = arith.constant 0.000000e+00 : f32
    %49 = vector.broadcast %cst_25 : f32 to vector<16x32xf32>
    %50 = arith.maximumf %48, %49 : vector<16x32xf32>
    %51 = arith.truncf %50 : vector<16x32xf32> to vector<16x32xbf16>
    %c0_26 = arith.constant 0 : index
    %c0_27 = arith.constant 0 : index
    %52 = vector.load %arg9[%c0_26, %c0_27] : memref<32x128xbf16, #tpu.memory_space<vmem>>, vector<32x128xbf16>
    %cst_28 = arith.constant dense<0.000000e+00> : vector<16x128xf32>
    %53 = tpu.matmul %51, %52, %cst_28 {dimension_numbers = #tpu.dot_dimension_numbers<[1], [0], [0], [1], [0, 0, 1, 1], [], []>} : vector<16x32xbf16>, vector<32x128xbf16>, vector<16x128xf32> -> vector<16x128xf32>
    %54 = arith.truncf %53 : vector<16x128xf32> to vector<16x128xbf16>
    %cst_29 = arith.constant dense<0.000000e+00> : vector<16x128xf32>
    %55 = tpu.matmul %23, %54, %cst_29 {dimension_numbers = #tpu.dot_dimension_numbers<[1], [0], [0], [1], [0, 0, 1, 1], [], []>} : vector<16x16xbf16>, vector<16x128xbf16>, vector<16x128xf32> -> vector<16x128xf32>
    %c0_30 = arith.constant 0 : index
    %c0_31 = arith.constant 0 : index
    %56 = vector.load %arg10[%c0_30, %c0_31] : memref<1x128xf32, #tpu.memory_space<vmem>>, vector<1x128xf32>
    %57 = vector.broadcast %56 : vector<1x128xf32> to vector<16x128xf32>
    %58 = arith.addf %55, %57 : vector<16x128xf32>
    %c0_32 = arith.constant 0 : index
    %c0_33 = arith.constant 0 : index
    %59 = vector.load %arg11[%c0_32, %c0_33] : memref<16x128xf32, #tpu.memory_space<vmem>>, vector<16x128xf32>
    tpu.vector_store %arg11[%c0_32, %c0_33], %58 {strides = array<i32>} : memref<16x128xf32, #tpu.memory_space<vmem>>, vector<16x128xf32>,
    return
  }
  func.func @transform_0(%arg0: i32) -> (i32, i32) {
    %c0_i32 = arith.constant 0 : i32
    %c0_i32_0 = arith.constant 0 : i32
    %c0_i32_1 = arith.constant 0 : i32
    return %c0_i32, %c0_i32_0 : i32, i32
  }
  func.func @transform_1(%arg0: i32) -> (i32, i32) {
    %c0_i32 = arith.constant 0 : i32
    %c0_i32_0 = arith.constant 0 : i32
    %c0_i32_1 = arith.constant 0 : i32
    return %c0_i32, %c0_i32_0 : i32, i32
  }
  func.func @transform_2(%arg0: i32) -> (i32, i32) {
    %c0_i32 = arith.constant 0 : i32
    %c0_i32_0 = arith.constant 0 : i32
    %c0_i32_1 = arith.constant 0 : i32
    return %c0_i32, %c0_i32_0 : i32, i32
  }
  func.func @transform_3(%arg0: i32) -> (i32, i32) {
    %c0_i32 = arith.constant 0 : i32
    %c0_i32_0 = arith.constant 0 : i32
    %c0_i32_1 = arith.constant 0 : i32
    return %c0_i32, %c0_i32_0 : i32, i32
  }
  func.func @transform_4(%arg0: i32) -> (i32, i32) {
    %c0_i32 = arith.constant 0 : i32
    %c0_i32_0 = arith.constant 0 : i32
    %c0_i32_1 = arith.constant 0 : i32
    return %c0_i32, %c0_i32_0 : i32, i32
  }
  func.func @transform_5(%arg0: i32) -> (i32, i32) {
    %c0_i32 = arith.constant 0 : i32
    %c0_i32_0 = arith.constant 0 : i32
    %c0_i32_1 = arith.constant 0 : i32
    return %c0_i32, %c0_i32_0 : i32, i32
  }
  func.func @transform_6(%arg0: i32) -> (i32, i32) {
    %c0_i32 = arith.constant 0 : i32
    %c0_i32_0 = arith.constant 0 : i32
    %c0_i32_1 = arith.constant 0 : i32
    return %c0_i32, %c0_i32_0 : i32, i32
  }
  func.func @transform_7(%arg0: i32) -> (i32, i32) {
    %c0_i32 = arith.constant 0 : i32
    %c0_i32_0 = arith.constant 0 : i32
    %c0_i32_1 = arith.constant 0 : i32
    return %c0_i32, %c0_i32_0 : i32, i32
  }
  func.func @transform_8(%arg0: i32) -> (i32, i32) {
    %c0_i32 = arith.constant 0 : i32
    %c0_i32_0 = arith.constant 0 : i32
    %c0_i32_1 = arith.constant 0 : i32
    return %c0_i32, %c0_i32_0 : i32, i32
  }
  func.func @transform_9(%arg0: i32) -> (i32, i32) {
    %c0_i32 = arith.constant 0 : i32
    %c0_i32_0 = arith.constant 0 : i32
    %c0_i32_1 = arith.constant 0 : i32
    return %c0_i32, %c0_i32_0 : i32, i32
  }
  func.func @transform_10(%arg0: i32) -> (i32, i32) {
    %c0_i32 = arith.constant 0 : i32
    %c0_i32_0 = arith.constant 0 : i32
    %c0_i32_1 = arith.constant 0 : i32
    return %c0_i32, %c0_i32_0 : i32, i32
  }
}

</mosaic_0001>

<llo_original>
// kernel: tpu_custom_call.1
$region0: #{tpu_custom_call.1}
  #allocation0 [shape = 'u32[]', space=smem, size = 0x4, offset = 0x4, fixed_abs, tag = 'smem constant byte address 0x4 - core index']
  #allocation1 [shape = 'u32[144,128]{1,0:T(1,128)}', space=vmem, size = 0x12000, scoped, tag = 'internal scratch']
  %s0 = inlined_call_operand.vmem [shape: f32[16,8], index: 0, kind: input, shape index: {}]
  %s1 = inlined_call_operand.hbm [shape: bf16[8,96], index: 1, kind: input, shape index: {}]
  %s2 = inlined_call_operand.vmem [shape: f32[1,96], index: 2, kind: input, shape index: {}]
  %s3 = inlined_call_operand.hbm [shape: f32[1,32], index: 3, kind: input, shape index: {}]
  %s4 = inlined_call_operand.vmem [shape: bf16[32,32], index: 4, kind: input, shape index: {}]
  %s5 = inlined_call_operand.hbm [shape: f32[1,32], index: 5, kind: input, shape index: {}]
  %s6 = inlined_call_operand.vmem [shape: bf16[32,32], index: 6, kind: input, shape index: {}]
  %s7 = inlined_call_operand.vmem [shape: f32[1,32], index: 7, kind: input, shape index: {}]
  %s8 = inlined_call_operand.hbm [shape: bf16[32,128], index: 8, kind: input, shape index: {}]
  %s9 = inlined_call_operand.vmem [shape: f32[1,128], index: 9, kind: input, shape index: {}]
  %s10 = inlined_call_operand.hbm [shape: f32[16,128], index: 10, kind: output, shape index: {}]
  %s11 = sld [smem:[#allocation0]]
  $region66: #{tpu_custom_call.1} parent=0
    _
  %s13 = ssub.s32 1, %s11
  %s14 = scalar_select 0, %s13, %s11
  $region1: #{tpu_custom_call.1} parent=0
    #allocation2 [shape = 'u8[2048]{0}', space=vmem, size = 0x800, scoped, tag = 'input window, operand 1, single buffered']
    #allocation3 [shape = 's32[1]{0}', space=sflag, size = 0x4, scoped, tag = 'scoped memory for tpu_custom_call.1']
    #allocation4 [shape = 's32[1]{0}', space=sflag, size = 0x4, scoped, tag = 'scoped memory for tpu_custom_call.1']
    #allocation5 [shape = 'u8[512]{0}', space=vmem, size = 0x400, scoped, tag = 'input window, operand 3, single buffered']
    #allocation6 [shape = 's32[1]{0}', space=sflag, size = 0x4, scoped, tag = 'scoped memory for tpu_custom_call.1']
    #allocation7 [shape = 'u8[512]{0}', space=vmem, size = 0x400, scoped, tag = 'input window, operand 5, single buffered']
    #allocation8 [shape = 'u8[8192]{0}', space=vmem, size = 0x2000, scoped, tag = 'input window, operand 8, single buffered']
    #allocation9 [shape = 's32[1]{0}', space=sflag, size = 0x4, scoped, tag = 'scoped memory for tpu_custom_call.1']
    #allocation10 [shape = 'u8[8192]{0}', space=vmem, size = 0x2000, scoped, tag = 'output window, operand 0, single buffered']
    %15 = vsyncpa [#allocation3], 0
    %16 = vsyncpa [#allocation6], 0
    %17 = vsyncpa [#allocation9], 0
    %18 = vsyncpa [#allocation4], 0
    // Predicated region
    $region2: #{tpu_custom_call.1} parent=1 // pred_check
      _
    $region3: #{tpu_custom_call.1} parent=1 // pred_check_branch
      %20 = sbr.rel (0) target = $region5
    $region4: #{tpu_custom_call.1} parent=1 // pred_region
      _
    $region5: #{tpu_custom_call.1} parent=1 // pred_fallthru
      _
    // Predicated region
    $region6: #{tpu_custom_call.1} parent=1 // pred_check
      _
    $region7: #{tpu_custom_call.1} parent=1 // pred_check_branch
      %22 = sbr.rel (0) target = $region9
    $region8: #{tpu_custom_call.1} parent=1 // pred_region
      %s24 = ssub.s32 64, 64
      %25 = vsyncadd [#allocation3], %s24
      %s27 = sshll.u32 [#allocation2], 4
      %s28 = int_to_ptr.vmem [resolvable:$true] %s27
      %30 = dma.hbm_to_vmem [thread:$0]  %s1, 64, %s28, [#allocation3]
    $region9: #{tpu_custom_call.1} parent=1 // pred_fallthru
      _
    // Predicated region
    $region10: #{tpu_custom_call.1} parent=1 // pred_check
      _
    $region11: #{tpu_custom_call.1} parent=1 // pred_check_branch
      %32 = sbr.rel (0) target = $region13
    $region12: #{tpu_custom_call.1} parent=1 // pred_region
      _
    $region13: #{tpu_custom_call.1} parent=1 // pred_fallthru
      _
    // Predicated region
    $region14: #{tpu_custom_call.1} parent=1 // pred_check
      _
    $region15: #{tpu_custom_call.1} parent=1 // pred_check_branch
      %34 = sbr.rel (0) target = $region17
    $region16: #{tpu_custom_call.1} parent=1 // pred_region
      %s36 = ssub.s32 16, 16
      %37 = vsyncadd [#allocation6], %s36
      %s39 = sshll.u32 [#allocation5], 4
      %s40 = int_to_ptr.vmem [resolvable:$true] %s39
      %42 = dma.hbm_to_vmem [thread:$0]  %s3, 16, %s40, [#allocation6]
    $region17: #{tpu_custom_call.1} parent=1 // pred_fallthru
      _
    // Predicated region
    $region18: #{tpu_custom_call.1} parent=1 // pred_check
      _
    $region19: #{tpu_custom_call.1} parent=1 // pred_check_branch
      %44 = sbr.rel (0) target = $region21
    $region20: #{tpu_custom_call.1} parent=1 // pred_region
      _
    $region21: #{tpu_custom_call.1} parent=1 // pred_fallthru
      _
    // Predicated region
    $region22: #{tpu_custom_call.1} parent=1 // pred_check
      _
    $region23: #{tpu_custom_call.1} parent=1 // pred_check_branch
      %46 = sbr.rel (0) target = $region25
    $region24: #{tpu_custom_call.1} parent=1 // pred_region
      %s48 = ssub.s32 16, 16
      %49 = vsyncadd [#allocation6], %s48
      %s51 = sshll.u32 [#allocation7], 4
      %s52 = int_to_ptr.vmem [resolvable:$true] %s51
      %54 = dma.hbm_to_vmem [thread:$0]  %s5, 16, %s52, [#allocation6]
    $region25: #{tpu_custom_call.1} parent=1 // pred_fallthru
      _
    // Predicated region
    $region26: #{tpu_custom_call.1} parent=1 // pred_check
      _
    $region27: #{tpu_custom_call.1} parent=1 // pred_check_branch
      %56 = sbr.rel (0) target = $region29
    $region28: #{tpu_custom_call.1} parent=1 // pred_region
      _
    $region29: #{tpu_custom_call.1} parent=1 // pred_fallthru
      _
    // Predicated region
    $region30: #{tpu_custom_call.1} parent=1 // pred_check
      _
    $region31: #{tpu_custom_call.1} parent=1 // pred_check_branch
      %58 = sbr.rel (0) target = $region33
    $region32: #{tpu_custom_call.1} parent=1 // pred_region
      _
    $region33: #{tpu_custom_call.1} parent=1 // pred_fallthru
      _
    // Predicated region
    $region34: #{tpu_custom_call.1} parent=1 // pred_check
      _
    $region35: #{tpu_custom_call.1} parent=1 // pred_check_branch
      %60 = sbr.rel (0) target = $region37
    $region36: #{tpu_custom_call.1} parent=1 // pred_region
      %s62 = ssub.s32 256, 256
      %63 = vsyncadd [#allocation9], %s62
      %s64 = sshll.u32 [#allocation8], 4
      %s65 = int_to_ptr.vmem [resolvable:$true] %s64
      %70 = dma.hbm_to_vmem [thread:$0]  %s8, 256, %s65, [#allocation9], 64, 64, 4
    $region37: #{tpu_custom_call.1} parent=1 // pred_fallthru
      _
    // Predicated region
    $region38: #{tpu_custom_call.1} parent=1 // pred_check
      _
    $region39: #{tpu_custom_call.1} parent=1 // pred_check_branch
      %72 = sbr.rel (0) target = $region41
    $region40: #{tpu_custom_call.1} parent=1 // pred_region
      _
    $region41: #{tpu_custom_call.1} parent=1 // pred_fallthru
      _
    // Predicated region
    $region42: #{tpu_custom_call.1} parent=1 // pred_check
      _
    $region43: #{tpu_custom_call.1} parent=1 // pred_check_branch
      %74 = sbr.rel (0) target = $region45
    $region44: #{tpu_custom_call.1} parent=1 // pred_region
      %75 = dma.done [#allocation3], 64
    $region45: #{tpu_custom_call.1} parent=1 // pred_fallthru
      _
    // Predicated region
    $region46: #{tpu_custom_call.1} parent=1 // pred_check
      _
    $region47: #{tpu_custom_call.1} parent=1 // pred_check_branch
      %77 = sbr.rel (0) target = $region49
    $region48: #{tpu_custom_call.1} parent=1 // pred_region
      %78 = dma.done [#allocation6], 16
    $region49: #{tpu_custom_call.1} parent=1 // pred_fallthru
      _
    // Predicated region
    $region50: #{tpu_custom_call.1} parent=1 // pred_check
      _
    $region51: #{tpu_custom_call.1} parent=1 // pred_check_branch
      %80 = sbr.rel (0) target = $region53
    $region52: #{tpu_custom_call.1} parent=1 // pred_region
      %81 = dma.done [#allocation6], 16
    $region53: #{tpu_custom_call.1} parent=1 // pred_fallthru
      _
    // Predicated region
    $region54: #{tpu_custom_call.1} parent=1 // pred_check
      _
    $region55: #{tpu_custom_call.1} parent=1 // pred_check_branch
      %83 = sbr.rel (0) target = $region57
    $region56: #{tpu_custom_call.1} parent=1 // pred_region
      %84 = dma.done [#allocation9], 256
    $region57: #{tpu_custom_call.1} parent=1 // pred_fallthru
      _
    %v86 = vld [vmem:[%s0] sm:$0xff]
    %v87 = vld [vmem:[%s0 + $0x8] sm:$0xff]
    %v88 = vpack.c.bf16 %v87, %v86
    %v89 = vld [vmem:[#allocation2] sm:$0xf]
    %v90 = vld [vmem:[%s2] sm:$0x1]
    %v92 = vlaneseq
    %v93 = vshrl.u32 %v92, 7
    %v94 = vsub.s32 0, %v93
    %v95 = vrot.slane %v90, %v94
    %vm97 = vcmask 64512
    %v99 = vsel %vm97, %v88, 0
    %vm101 = vcmask 1043456
    %v103 = vsel %vm101, %v89, 0
    %105 = vmatprep.subr.bf16.mxu0 0
    %106 = vmatpush1.bf16.msra.mxu0 0
    %107 = vmatprep.subr.bf16.mxu0 0
    %108 = vmatpush1.bf16.msra.mxu0 0
    %109 = vmatprep.subr.bf16.mxu0 0
    %110 = vmatpush1.bf16.msra.mxu0 0
    %111 = vmatprep.subr.bf16.mxu0 0
    %112 = vmatpush1.bf16.msra.mxu0 0
    %113 = vmatprep.subr.bf16.mxu0 0
    %114 = vmatpush1.bf16.msra.mxu0 0
    %115 = vmatprep.subr.bf16.mxu0 0
    %116 = vmatpush1.bf16.msra.mxu0 0
    %117 = vmatprep.subr.bf16.mxu0 0
    %118 = vmatpush1.bf16.msra.mxu0 0
    %119 = vmatprep.subr.bf16.mxu0 0
    %120 = vmatpush1.bf16.msra.mxu0 %v103
    %121 = vmatprep.subr.bf16.mxu0 0
    %122 = vmatpush2.bf16.msra.mxu0 0
    %123 = vmatprep.subr.bf16.mxu0 0
    %124 = vmatpush2.bf16.msra.mxu0 0
    %125 = vmatprep.subr.bf16.mxu0 0
    %126 = vmatpush2.bf16.msra.mxu0 0
    %127 = vmatprep.subr.bf16.mxu0 0
    %128 = vmatpush2.bf16.msra.mxu0 0
    %129 = vmatprep.subr.bf16.mxu0 0
    %130 = vmatpush2.bf16.msra.mxu0 0
    %131 = vmatprep.subr.bf16.mxu0 0
    %132 = vmatpush2.bf16.msra.mxu0 0
    %133 = vmatprep.subr.bf16.mxu0 0
    %134 = vmatpush2.bf16.msra.mxu0 0
    %135 = vmatprep.subr.bf16.mxu0 0
    %136 = vmatpush2.bf16.msra.mxu0 0
    %137 = vmatprep.mubr.bf16.mxu0 0
    %138 = vmatmul.mubr.bf16.gmra.mxu0 %v99
    %v139 = vpop.f32.mrf.mxu0
    %v140 = vadd.f32 %v95, %v139
    %v141 = vpop.f32.mrf.mxu0
    %v142 = vpop.f32.mrf.mxu0
    %v143 = vadd.f32 %v95, %v142
    %v144 = vpop.f32.mrf.mxu0
    %145 = vdwg.mxu0
    %v146 = vpack.c.bf16 %v143, %v140
    %148 = vrot.lane.b32.xlu0 %v146, 96
    %v149 = vpop.permute.xlu0 %148
    %vm150 = vcmask 261120
    %v152 = vsel %vm150, %v146, 0
    %v155 = vsel %vm150, %v149, 0
    %157 = vmatprep.subr.bf16.mxu0 0
    %158 = vmatpush1.bf16.xpose.msra.mxu0 0
    %159 = vmatprep.subr.bf16.mxu0 0
    %160 = vmatpush1.bf16.xpose.msra.mxu0 0
    %161 = vmatprep.subr.bf16.mxu0 0
    %162 = vmatpush1.bf16.xpose.msra.mxu0 0
    %163 = vmatprep.subr.bf16.mxu0 0
    %164 = vmatpush1.bf16.xpose.msra.mxu0 0
    %165 = vmatprep.subr.bf16.mxu0 0
    %166 = vmatpush1.bf16.xpose.msra.mxu0 0
    %167 = vmatprep.subr.bf16.mxu0 0
    %168 = vmatpush1.bf16.xpose.msra.mxu0 0
    %169 = vmatprep.subr.bf16.mxu0 0
    %170 = vmatpush1.bf16.xpose.msra.mxu0 0
    %171 = vmatprep.subr.bf16.mxu0 0
    %172 = vmatpush1.bf16.xpose.msra.mxu0 %v155
    %173 = vmatprep.subr.bf16.mxu0 0
    %174 = vmatpush2.bf16.xpose.msra.mxu0 0
    %175 = vmatprep.subr.bf16.mxu0 0
    %176 = vmatpush2.bf16.xpose.msra.mxu0 0
    %177 = vmatprep.subr.bf16.mxu0 0
    %178 = vmatpush2.bf16.xpose.msra.mxu0 0
    %179 = vmatprep.subr.bf16.mxu0 0
    %180 = vmatpush2.bf16.xpose.msra.mxu0 0
    %181 = vmatprep.subr.bf16.mxu0 0
    %182 = vmatpush2.bf16.xpose.msra.mxu0 0
    %183 = vmatprep.subr.bf16.mxu0 0
    %184 = vmatpush2.bf16.xpose.msra.mxu0 0
    %185 = vmatprep.subr.bf16.mxu0 0
    %186 = vmatpush2.bf16.xpose.msra.mxu0 0
    %187 = vmatprep.subr.bf16.mxu0 0
    %188 = vmatpush2.bf16.xpose.msra.mxu0 0
    %189 = vmatprep.mubr.bf16.mxu0 0
    %190 = vmatmul.mubr.bf16.gmra.mxu0 %v152
    %v191 = vpop.f32.mrf.mxu0
    %v192 = vadd.f32 0.0, %v191
    %v193 = vpop.f32.mrf.mxu0
    %v194 = vpop.f32.mrf.mxu0
    %v195 = vadd.f32 0.0, %v194
    %v196 = vpop.f32.mrf.mxu0
    %197 = vdwg.mxu0
    %vm198 = vcmask 130048
    %v199 = vsel %vm198, %v192, -inf
    %200 = vmax.xlane.f32.xlu0 %v199
    %v201 = vpop.xlane.xlu0 %200
    %v202 = vsel %vm198, %v195, -inf
    %203 = vmax.xlane.f32.xlu0 %v202
    %v204 = vpop.xlane.xlu0 %203
    %v205 = vsub.f32 %v192, %v201
    %v206 = vsub.f32 %v195, %v204
    %v207 = vmul.f32 %v205, 1.442695
    %v208 = vpow.pop %v207
    %v209 = vmul.f32 %v206, 1.442695
    %v210 = vpow.pop %v209
    %v211 = vsel %vm198, %v208, 0.0
    %212 = vadd.xlane.f32.xlu0 %v211
    %v213 = vpop.xlane.xlu0 %212
    %v214 = vsel %vm198, %v210, 0.0
    %215 = vadd.xlane.f32.xlu0 %v214
    %v216 = vpop.xlane.xlu0 %215
    %v217 = vrcp.pop %v213
    %v218 = vrcp.pop %v216
    %v219 = vmul.f32 %v208, %v217
    %v220 = vmul.f32 %v210, %v218
    %v221 = vpack.c.bf16 %v220, %v219
    %v222 = vld [vmem:[#allocation5] sm:$0x1]
    %v224 = vlaneseq
    %v225 = vshrl.u32 %v224, 7
    %v226 = vsub.s32 0, %v225
    %v227 = vrot.slane %v222, %v226
    %229 = vrot.lane.b32.xlu0 %v146, 64
    %v230 = vpop.permute.xlu0 %229
    %v233 = vsel %vm198, %v221, 0
    %235 = vmatprep.subr.bf16.mxu0 0
    %236 = vmatpush1.bf16.msra.mxu0 0
    %237 = vmatprep.subr.bf16.mxu0 0
    %238 = vmatpush1.bf16.msra.mxu0 0
    %239 = vmatprep.subr.bf16.mxu0 0
    %240 = vmatpush1.bf16.msra.mxu0 0
    %241 = vmatprep.subr.bf16.mxu0 0
    %242 = vmatpush1.bf16.msra.mxu0 0
    %243 = vmatprep.subr.bf16.mxu0 0
    %244 = vmatpush1.bf16.msra.mxu0 0
    %245 = vmatprep.subr.bf16.mxu0 0
    %246 = vmatpush1.bf16.msra.mxu0 0
    %247 = vmatprep.subr.bf16.mxu0 0
    %248 = vmatpush1.bf16.msra.mxu0 0
    %249 = vmatprep.subr.bf16.mxu0 0
    %250 = vmatpush1.bf16.msra.mxu0 %v230
    %251 = vmatprep.subr.bf16.mxu0 0
    %252 = vmatpush2.bf16.msra.mxu0 0
    %253 = vmatprep.subr.bf16.mxu0 0
    %254 = vmatpush2.bf16.msra.mxu0 0
    %255 = vmatprep.subr.bf16.mxu0 0
    %256 = vmatpush2.bf16.msra.mxu0 0
    %257 = vmatprep.subr.bf16.mxu0 0
    %258 = vmatpush2.bf16.msra.mxu0 0
    %259 = vmatprep.subr.bf16.mxu0 0
    %260 = vmatpush2.bf16.msra.mxu0 0
    %261 = vmatprep.subr.bf16.mxu0 0
    %262 = vmatpush2.bf16.msra.mxu0 0
    %263 = vmatprep.subr.bf16.mxu0 0
    %264 = vmatpush2.bf16.msra.mxu0 0
    %265 = vmatprep.subr.bf16.mxu0 0
    %266 = vmatpush2.bf16.msra.mxu0 0
    %267 = vmatprep.mubr.bf16.mxu0 0
    %268 = vmatmul.mubr.bf16.gmra.mxu0 %v233
    %v269 = vpop.f32.mrf.mxu0
    %v270 = vadd.f32 %v227, %v269
    %v271 = vpop.f32.mrf.mxu0
    %v272 = vpop.f32.mrf.mxu0
    %v273 = vadd.f32 %v227, %v272
    %v274 = vpop.f32.mrf.mxu0
    %275 = vdwg.mxu0
    %v276 = vmax.f32 %v270, 0.0
    %v277 = vmax.f32 %v273, 0.0
    %v278 = vpack.c.bf16 %v277, %v276
    %v279 = vld [vmem:[%s4] sm:$0xf]
    %v280 = vld [vmem:[%s4 + $0x4] sm:$0xf]
    %v281 = vld [vmem:[%s4 + $0x8] sm:$0xf]
    %v282 = vld [vmem:[%s4 + $0xc] sm:$0xf]
    %v287 = vunpack.c.l.b16 %v279
    %v288 = vunpack.c.l.b16 %v280
    %v289 = vunpack.c.l.b16 %v281
    %v290 = vunpack.c.l.b16 %v282
    %v291 = vpack.c.b16 %v288, %v287
    %v292 = vpack.c.b16 %v290, %v289
    %v296 = vsel %vm150, %v278, 0
    %298 = vmatprep.subr.bf16.mxu0 0
    %299 = vmatpush1.bf16.msra.mxu0 0
    %300 = vmatprep.subr.bf16.mxu0 0
    %301 = vmatpush1.bf16.msra.mxu0 0
    %302 = vmatprep.subr.bf16.mxu0 0
    %303 = vmatpush1.bf16.msra.mxu0 0
    %304 = vmatprep.subr.bf16.mxu0 0
    %305 = vmatpush1.bf16.msra.mxu0 0
    %306 = vmatprep.subr.bf16.mxu0 0
    %307 = vmatpush1.bf16.msra.mxu0 0
    %308 = vmatprep.subr.bf16.mxu0 0
    %309 = vmatpush1.bf16.msra.mxu0 0
    %310 = vmatprep.subr.bf16.mxu0 0
    %311 = vmatpush1.bf16.msra.mxu0 %v292
    %312 = vmatprep.subr.bf16.mxu0 0
    %313 = vmatpush1.bf16.msra.mxu0 %v291
    %314 = vmatprep.subr.bf16.mxu0 0
    %315 = vmatpush2.bf16.msra.mxu0 0
    %316 = vmatprep.subr.bf16.mxu0 0
    %317 = vmatpush2.bf16.msra.mxu0 0
    %318 = vmatprep.subr.bf16.mxu0 0
    %319 = vmatpush2.bf16.msra.mxu0 0
    %320 = vmatprep.subr.bf16.mxu0 0
    %321 = vmatpush2.bf16.msra.mxu0 0
    %322 = vmatprep.subr.bf16.mxu0 0
    %323 = vmatpush2.bf16.msra.mxu0 0
    %324 = vmatprep.subr.bf16.mxu0 0
    %325 = vmatpush2.bf16.msra.mxu0 0
    %326 = vmatprep.subr.bf16.mxu0 0
    %327 = vmatpush2.bf16.msra.mxu0 0
    %328 = vmatprep.subr.bf16.mxu0 0
    %329 = vmatpush2.bf16.msra.mxu0 0
    %330 = vmatprep.mubr.bf16.mxu0 0
    %331 = vmatmul.mubr.bf16.gmra.mxu0 %v296
    %v332 = vpop.f32.mrf.mxu0
    %v333 = vadd.f32 0.0, %v332
    %v334 = vpop.f32.mrf.mxu0
    %v335 = vpop.f32.mrf.mxu0
    %v336 = vadd.f32 0.0, %v335
    %v337 = vpop.f32.mrf.mxu0
    %338 = vdwg.mxu0
    %v339 = vpack.c.bf16 %v336, %v333
    %v340 = vld [vmem:[#allocation7] sm:$0x1]
    %v342 = vlaneseq
    %v343 = vshrl.u32 %v342, 7
    %v344 = vsub.s32 0, %v343
    %v345 = vrot.slane %v340, %v344
    %347 = vmatprep.subr.bf16.mxu0 0
    %348 = vmatpush1.bf16.msra.mxu0 0
    %349 = vmatprep.subr.bf16.mxu0 0
    %350 = vmatpush1.bf16.msra.mxu0 0
    %351 = vmatprep.subr.bf16.mxu0 0
    %352 = vmatpush1.bf16.msra.mxu0 0
    %353 = vmatprep.subr.bf16.mxu0 0
    %354 = vmatpush1.bf16.msra.mxu0 0
    %355 = vmatprep.subr.bf16.mxu0 0
    %356 = vmatpush1.bf16.msra.mxu0 0
    %357 = vmatprep.subr.bf16.mxu0 0
    %358 = vmatpush1.bf16.msra.mxu0 0
    %359 = vmatprep.subr.bf16.mxu0 0
    %360 = vmatpush1.bf16.msra.mxu0 0
    %361 = vmatprep.subr.bf16.mxu0 0
    %362 = vmatpush1.bf16.msra.mxu0 %v339
    %363 = vmatprep.subr.bf16.mxu0 0
    %364 = vmatpush2.bf16.msra.mxu0 0
    %365 = vmatprep.subr.bf16.mxu0 0
    %366 = vmatpush2.bf16.msra.mxu0 0
    %367 = vmatprep.subr.bf16.mxu0 0
    %368 = vmatpush2.bf16.msra.mxu0 0
    %369 = vmatprep.subr.bf16.mxu0 0
    %370 = vmatpush2.bf16.msra.mxu0 0
    %371 = vmatprep.subr.bf16.mxu0 0
    %372 = vmatpush2.bf16.msra.mxu0 0
    %373 = vmatprep.subr.bf16.mxu0 0
    %374 = vmatpush2.bf16.msra.mxu0 0
    %375 = vmatprep.subr.bf16.mxu0 0
    %376 = vmatpush2.bf16.msra.mxu0 0
    %377 = vmatprep.subr.bf16.mxu0 0
    %378 = vmatpush2.bf16.msra.mxu0 0
    %379 = vmatprep.mubr.bf16.mxu0 0
    %380 = vmatmul.mubr.bf16.gmra.mxu0 %v233
    %v381 = vpop.f32.mrf.mxu0
    %v382 = vadd.f32 %v345, %v381
    %v383 = vpop.f32.mrf.mxu0
    %v384 = vpop.f32.mrf.mxu0
    %v385 = vadd.f32 %v345, %v384
    %v386 = vpop.f32.mrf.mxu0
    %387 = vdwg.mxu0
    %v388 = vmax.f32 %v382, 0.0
    %v389 = vmax.f32 %v385, 0.0
    %v390 = vpack.c.bf16 %v389, %v388
    %v391 = vld [vmem:[%s6] sm:$0xf]
    %v392 = vld [vmem:[%s6 + $0x4] sm:$0xf]
    %v393 = vld [vmem:[%s6 + $0x8] sm:$0xf]
    %v394 = vld [vmem:[%s6 + $0xc] sm:$0xf]
    %v399 = vunpack.c.l.b16 %v391
    %v400 = vunpack.c.l.b16 %v392
    %v401 = vunpack.c.l.b16 %v393
    %v402 = vunpack.c.l.b16 %v394
    %v403 = vpack.c.b16 %v400, %v399
    %v404 = vpack.c.b16 %v402, %v401
    %v408 = vsel %vm150, %v390, 0
    %410 = vmatprep.subr.bf16.mxu0 0
    %411 = vmatpush1.bf16.msra.mxu0 0
    %412 = vmatprep.subr.bf16.mxu0 0
    %413 = vmatpush1.bf16.msra.mxu0 0
    %414 = vmatprep.subr.bf16.mxu0 0
    %415 = vmatpush1.bf16.msra.mxu0 0
    %416 = vmatprep.subr.bf16.mxu0 0
    %417 = vmatpush1.bf16.msra.mxu0 0
    %418 = vmatprep.subr.bf16.mxu0 0
    %419 = vmatpush1.bf16.msra.mxu0 0
    %420 = vmatprep.subr.bf16.mxu0 0
    %421 = vmatpush1.bf16.msra.mxu0 0
    %422 = vmatprep.subr.bf16.mxu0 0
    %423 = vmatpush1.bf16.msra.mxu0 %v404
    %424 = vmatprep.subr.bf16.mxu0 0
    %425 = vmatpush1.bf16.msra.mxu0 %v403
    %426 = vmatprep.subr.bf16.mxu0 0
    %427 = vmatpush2.bf16.msra.mxu0 0
    %428 = vmatprep.subr.bf16.mxu0 0
    %429 = vmatpush2.bf16.msra.mxu0 0
    %430 = vmatprep.subr.bf16.mxu0 0
    %431 = vmatpush2.bf16.msra.mxu0 0
    %432 = vmatprep.subr.bf16.mxu0 0
    %433 = vmatpush2.bf16.msra.mxu0 0
    %434 = vmatprep.subr.bf16.mxu0 0
    %435 = vmatpush2.bf16.msra.mxu0 0
    %436 = vmatprep.subr.bf16.mxu0 0
    %437 = vmatpush2.bf16.msra.mxu0 0
    %438 = vmatprep.subr.bf16.mxu0 0
    %439 = vmatpush2.bf16.msra.mxu0 0
    %440 = vmatprep.subr.bf16.mxu0 0
    %441 = vmatpush2.bf16.msra.mxu0 0
    %442 = vmatprep.mubr.bf16.mxu0 0
    %443 = vmatmul.mubr.bf16.gmra.mxu0 %v408
    %v444 = vpop.f32.mrf.mxu0
    %v445 = vadd.f32 0.0, %v444
    %v446 = vpop.f32.mrf.mxu0
    %v447 = vpop.f32.mrf.mxu0
    %v448 = vadd.f32 0.0, %v447
    %v449 = vpop.f32.mrf.mxu0
    %450 = vdwg.mxu0
    %v451 = vpack.c.bf16 %v448, %v445
    %v452 = vld [vmem:[%s7] sm:$0x1]
    %v454 = vlaneseq
    %v455 = vshrl.u32 %v454, 7
    %v456 = vsub.s32 0, %v455
    %v457 = vrot.slane %v452, %v456
    %459 = vmatprep.subr.bf16.mxu0 0
    %460 = vmatpush1.bf16.msra.mxu0 0
    %461 = vmatprep.subr.bf16.mxu0 0
    %462 = vmatpush1.bf16.msra.mxu0 0
    %463 = vmatprep.subr.bf16.mxu0 0
    %464 = vmatpush1.bf16.msra.mxu0 0
    %465 = vmatprep.subr.bf16.mxu0 0
    %466 = vmatpush1.bf16.msra.mxu0 0
    %467 = vmatprep.subr.bf16.mxu0 0
    %468 = vmatpush1.bf16.msra.mxu0 0
    %469 = vmatprep.subr.bf16.mxu0 0
    %470 = vmatpush1.bf16.msra.mxu0 0
    %471 = vmatprep.subr.bf16.mxu0 0
    %472 = vmatpush1.bf16.msra.mxu0 0
    %473 = vmatprep.subr.bf16.mxu0 0
    %474 = vmatpush1.bf16.msra.mxu0 %v451
    %475 = vmatprep.subr.bf16.mxu0 0
    %476 = vmatpush2.bf16.msra.mxu0 0
    %477 = vmatprep.subr.bf16.mxu0 0
    %478 = vmatpush2.bf16.msra.mxu0 0
    %479 = vmatprep.subr.bf16.mxu0 0
    %480 = vmatpush2.bf16.msra.mxu0 0
    %481 = vmatprep.subr.bf16.mxu0 0
    %482 = vmatpush2.bf16.msra.mxu0 0
    %483 = vmatprep.subr.bf16.mxu0 0
    %484 = vmatpush2.bf16.msra.mxu0 0
    %485 = vmatprep.subr.bf16.mxu0 0
    %486 = vmatpush2.bf16.msra.mxu0 0
    %487 = vmatprep.subr.bf16.mxu0 0
    %488 = vmatpush2.bf16.msra.mxu0 0
    %489 = vmatprep.subr.bf16.mxu0 0
    %490 = vmatpush2.bf16.msra.mxu0 0
    %491 = vmatprep.mubr.bf16.mxu0 0
    %492 = vmatmul.mubr.bf16.gmra.mxu0 %v233
    %v493 = vpop.f32.mrf.mxu0
    %v494 = vadd.f32 %v457, %v493
    %v495 = vpop.f32.mrf.mxu0
    %v496 = vpop.f32.mrf.mxu0
    %v497 = vadd.f32 %v457, %v496
    %v498 = vpop.f32.mrf.mxu0
    %499 = vdwg.mxu0
    %v500 = vmax.f32 %v494, 0.0
    %v501 = vmax.f32 %v497, 0.0
    %v502 = vpack.c.bf16 %v501, %v500
    %v503 = vld [vmem:[#allocation8] sm:$0xf]
    %v504 = vld [vmem:[#allocation8 + $0x4] sm:$0xf]
    %v505 = vld [vmem:[#allocation8 + $0x8] sm:$0xf]
    %v506 = vld [vmem:[#allocation8 + $0xc] sm:$0xf]
    %v511 = vunpack.c.l.b16 %v503
    %v512 = vunpack.c.l.b16 %v504
    %v513 = vunpack.c.l.b16 %v505
    %v514 = vunpack.c.l.b16 %v506
    %v515 = vpack.c.b16 %v512, %v511
    %v516 = vpack.c.b16 %v514, %v513
    %v520 = vsel %vm150, %v502, 0
    %522 = vmatprep.subr.bf16.mxu0 0
    %523 = vmatpush1.bf16.msra.mxu0 0
    %524 = vmatprep.subr.bf16.mxu0 0
    %525 = vmatpush1.bf16.msra.mxu0 0
    %526 = vmatprep.subr.bf16.mxu0 0
    %527 = vmatpush1.bf16.msra.mxu0 0
    %528 = vmatprep.subr.bf16.mxu0 0
    %529 = vmatpush1.bf16.msra.mxu0 0
    %530 = vmatprep.subr.bf16.mxu0 0
    %531 = vmatpush1.bf16.msra.mxu0 0
    %532 = vmatprep.subr.bf16.mxu0 0
    %533 = vmatpush1.bf16.msra.mxu0 0
    %534 = vmatprep.subr.bf16.mxu0 0
    %535 = vmatpush1.bf16.msra.mxu0 %v516
    %536 = vmatprep.subr.bf16.mxu0 0
    %537 = vmatpush1.bf16.msra.mxu0 %v515
    %538 = vmatprep.subr.bf16.mxu0 0
    %539 = vmatpush2.bf16.msra.mxu0 0
    %540 = vmatprep.subr.bf16.mxu0 0
    %541 = vmatpush2.bf16.msra.mxu0 0
    %542 = vmatprep.subr.bf16.mxu0 0
    %543 = vmatpush2.bf16.msra.mxu0 0
    %544 = vmatprep.subr.bf16.mxu0 0
    %545 = vmatpush2.bf16.msra.mxu0 0
    %546 = vmatprep.subr.bf16.mxu0 0
    %547 = vmatpush2.bf16.msra.mxu0 0
    %548 = vmatprep.subr.bf16.mxu0 0
    %549 = vmatpush2.bf16.msra.mxu0 0
    %550 = vmatprep.subr.bf16.mxu0 0
    %551 = vmatpush2.bf16.msra.mxu0 0
    %552 = vmatprep.subr.bf16.mxu0 0
    %553 = vmatpush2.bf16.msra.mxu0 0
    %554 = vmatprep.mubr.bf16.mxu0 0
    %555 = vmatmul.mubr.bf16.gmra.mxu0 %v520
    %v556 = vpop.f32.mrf.mxu0
    %v557 = vadd.f32 0.0, %v556
    %v558 = vpop.f32.mrf.mxu0
    %v559 = vpop.f32.mrf.mxu0
    %v560 = vadd.f32 0.0, %v559
    %v561 = vpop.f32.mrf.mxu0
    %562 = vdwg.mxu0
    %v563 = vpack.c.bf16 %v560, %v557
    %v564 = vld [vmem:[%s9] sm:$0x1]
    %v566 = vlaneseq
    %v567 = vshrl.u32 %v566, 7
    %v568 = vsub.s32 0, %v567
    %v569 = vrot.slane %v564, %v568
    %571 = vmatprep.subr.bf16.mxu0 0
    %572 = vmatpush1.bf16.msra.mxu0 0
    %573 = vmatprep.subr.bf16.mxu0 0
    %574 = vmatpush1.bf16.msra.mxu0 0
    %575 = vmatprep.subr.bf16.mxu0 0
    %576 = vmatpush1.bf16.msra.mxu0 0
    %577 = vmatprep.subr.bf16.mxu0 0
    %578 = vmatpush1.bf16.msra.mxu0 0
    %579 = vmatprep.subr.bf16.mxu0 0
    %580 = vmatpush1.bf16.msra.mxu0 0
    %581 = vmatprep.subr.bf16.mxu0 0
    %582 = vmatpush1.bf16.msra.mxu0 0
    %583 = vmatprep.subr.bf16.mxu0 0
    %584 = vmatpush1.bf16.msra.mxu0 0
    %585 = vmatprep.subr.bf16.mxu0 0
    %586 = vmatpush1.bf16.msra.mxu0 %v563
    %587 = vmatprep.subr.bf16.mxu0 0
    %588 = vmatpush2.bf16.msra.mxu0 0
    %589 = vmatprep.subr.bf16.mxu0 0
    %590 = vmatpush2.bf16.msra.mxu0 0
    %591 = vmatprep.subr.bf16.mxu0 0
    %592 = vmatpush2.bf16.msra.mxu0 0
    %593 = vmatprep.subr.bf16.mxu0 0
    %594 = vmatpush2.bf16.msra.mxu0 0
    %595 = vmatprep.subr.bf16.mxu0 0
    %596 = vmatpush2.bf16.msra.mxu0 0
    %597 = vmatprep.subr.bf16.mxu0 0
    %598 = vmatpush2.bf16.msra.mxu0 0
    %599 = vmatprep.subr.bf16.mxu0 0
    %600 = vmatpush2.bf16.msra.mxu0 0
    %601 = vmatprep.subr.bf16.mxu0 0
    %602 = vmatpush2.bf16.msra.mxu0 0
    %603 = vmatprep.mubr.bf16.mxu0 0
    %604 = vmatmul.mubr.bf16.gmra.mxu0 %v233
    %v605 = vpop.f32.mrf.mxu0
    %v606 = vadd.f32 %v569, %v605
    %v607 = vpop.f32.mrf.mxu0
    %v608 = vpop.f32.mrf.mxu0
    %v609 = vadd.f32 %v569, %v608
    %v610 = vpop.f32.mrf.mxu0
    %611 = vdwg.mxu0
    %612 = vst [vmem:[#allocation10] sm:$0xff] %v606
    %613 = vst [vmem:[#allocation10 + $0x8] sm:$0xff] %v609
    // Predicated region
    $region58: #{tpu_custom_call.1} parent=1 // pred_check
      _
    $region59: #{tpu_custom_call.1} parent=1 // pred_check_branch
      %615 = sbr.rel (0) target = $region61
    $region60: #{tpu_custom_call.1} parent=1 // pred_region
      %s617 = ssub.s32 256, 256
      %618 = vsyncadd [#allocation4], %s617
      %s619 = sshll.u32 [#allocation10], 4
      %s620 = int_to_ptr.vmem [resolvable:$true] %s619
      %625 = dma.vmem_to_hbm [thread:$0]  %s620, 256, %s10, [#allocation4], 128, 128, 8
    $region61: #{tpu_custom_call.1} parent=1 // pred_fallthru
      _
    // Predicated region
    $region62: #{tpu_custom_call.1} parent=1 // pred_check
      _
    $region63: #{tpu_custom_call.1} parent=1 // pred_check_branch
      %627 = sbr.rel (0) target = $region65
    $region64: #{tpu_custom_call.1} parent=1 // pred_region
      %628 = dma.done [#allocation4], 256
    $region65: #{tpu_custom_call.1} parent=1 // pred_fallthru
      _
    %629 = vsyncpa [#allocation3], 1
    %630 = vsyncpa [#allocation6], 1
    %631 = vsyncpa [#allocation9], 1
    %632 = vsyncpa [#allocation4], 1

</llo_original>
